<compile_context>
chip_gen: v6e
topology: v6e:2x2x1
jax: 0.10.0
libtpu: 0.0.40
codegen_flags: <defaults>
</compile_context>

<pallas_src>
import functools

import jax
import jax.numpy as jnp
from jax.experimental import pallas as pl
from jax.experimental.pallas import tpu as pltpu

EPS = 1e-5
NEG_SLOPE = 0.2
_VMEM_BUDGET = 48 * 1024 * 1024   # conservative for v7x (64 MiB physical VMEM)


def _dcgan_conv_kernel(w_ref, p_ref, gamma_ref, beta_ref, o_ref,
                       sum_ref, ssq_ref, *rest, m_total, resident_y):
    # w_ref:     [Cout, K]       flattened conv weight (resident across the grid)
    # p_ref:     [K, tm]         transposed im2col tile (M on the lane axis)
    # gamma/beta:[Cout, 1]       BN affine params (f32)
    # o_ref:     [Cout, tm]      output tile (lane-dense)
    # sum_ref/ssq_ref: [Cout, 1] f32 scratch; after phase-0 finalize they carry scale/shift.
    # rest[0] (if resident_y):   [nmt, Cout, tm] f32 resident conv-output scratch.
    y_ref = rest[0] if resident_y else None
    phase = pl.program_id(0)
    mt = pl.program_id(1)
    nmt = pl.num_programs(1)

    # -------- phase 0: conv matmul + per-channel sum / sum-of-squares --------------------
    @pl.when(phase == 0)
    def _stats_pass():
        @pl.when(mt == 0)
        def _init():
            sum_ref[...] = jnp.zeros_like(sum_ref)
            ssq_ref[...] = jnp.zeros_like(ssq_ref)

        # [Cout, K] @ [K, tm] -> [Cout, tm], f32 accumulation on the MXU.
        y = jnp.dot(w_ref[...], p_ref[...], preferred_element_type=jnp.float32)
        if resident_y:
            y_ref[mt] = y                                  # keep conv output resident in VMEM
        sum_ref[...] += jnp.sum(y, axis=1, keepdims=True)
        ssq_ref[...] += jnp.sum(y * y, axis=1, keepdims=True)

        @pl.when(mt == nmt - 1)
        def _finalize():
            inv_m = 1.0 / m_total
            mean = sum_ref[...] * inv_m
            # Clamp: E[y^2] - mean^2 can round slightly negative in f32.
            var = jnp.maximum(ssq_ref[...] * inv_m - mean * mean, 0.0)
            scale = gamma_ref[...] * jax.lax.rsqrt(var + EPS)
            shift = beta_ref[...] - mean * scale
            sum_ref[...] = scale                           # reuse accumulators to carry
            ssq_ref[...] = shift                           # scale/shift into phase 1

    # -------- phase 1: fused BN affine + LeakyReLU ----------------------------------------
    @pl.when(phase == 1)
    def _apply_pass():
        if resident_y:
            y = y_ref[mt]                                  # read conv tile from VMEM
        else:
            # Fallback for huge M: recompute the conv tile (p re-streamed from HBM).
            y = jnp.dot(w_ref[...], p_ref[...], preferred_element_type=jnp.float32)
        z = sum_ref[...] * y + ssq_ref[...]                # scale * y + shift (f32)
        o_ref[...] = jnp.maximum(z, NEG_SLOPE * z)         # LeakyReLU(0.2)


def _round_up(x, mult):
    return ((x + mult - 1) // mult) * mult


def _pick_m_tile(m_pad):
    """Largest of {2048,1024,512,256} dividing m_pad (m_pad is a multiple of 256)."""
    for cand in (2048, 1024, 512):
        if m_pad % cand == 0:
            return cand
    return 256


def dcgan_conv_forward(x, weight, bias, gamma, beta, *,
                       kernel_size=4, stride=2, padding=1,
                       matmul_dtype=jnp.bfloat16):
    """x: [N, Cin, H, W]; weight: [Cout, Cin, k, k]; returns [N, Cout, Ho, Wo] (f32)."""
    # `bias` is accepted for API parity with nn.Conv2d but is not applied: training-mode
    # BatchNorm subtracts the per-channel mean right after the conv, so a per-channel
    # bias cancels exactly and the variance is unaffected.
    del bias
    n, cin, h, w = x.shape
    cout = weight.shape[0]
    k, s, p = kernel_size, stride, padding
    ho = (h + 2 * p - k) // s + 1
    wo = (w + 2 * p - k) // s + 1
    m = n * ho * wo
    kk = cin * k * k

    # Transposed im2col: [K, M] with column order c*k*k + i*k + j (channel-major),
    # matching the natural row-major flatten of the PyTorch weight.
    xp = jnp.pad(x, ((0, 0), (0, 0), (p, p), (p, p)))
    xt = jnp.transpose(xp, (1, 0, 2, 3))                        # [Cin, N, Hp, Wp]
    taps = [xt[:, :, i:i + s * ho:s, j:j + s * wo:s]
            for i in range(k) for j in range(k)]                # each [Cin, N, Ho, Wo]
    p_t = jnp.stack(taps, axis=1).reshape(kk, m)                # [K, M]
    w_t = weight.reshape(cout, kk)                              # [Cout, K]

    # Pad M up to a multiple of 256 (lane-dense stores, full MXU-N passes on v6e/v7x).
    # Zero-padded columns give conv output exactly 0 (no bias), so BN sums are unaffected
    # as long as we divide by the true m.
    m_pad = _round_up(m, 256)
    tm = _pick_m_tile(m_pad)
    nmt = m_pad // tm
    if m_pad != m:
        p_t = jnp.pad(p_t, ((0, 0), (0, m_pad - m)))

    p_t = p_t.astype(matmul_dtype)
    w_t = w_t.astype(matmul_dtype)
    g2 = gamma.reshape(cout, 1).astype(jnp.float32)
    b2 = beta.reshape(cout, 1).astype(jnp.float32)

    # VMEM sizing: resident-y scratch (single read of p) if it fits the v7x-safe budget,
    # otherwise fall back to the recompute path.
    itemsize = jnp.dtype(matmul_dtype).itemsize
    pipe_bytes = (2 * kk * tm * itemsize          # double-buffered patch tiles
                  + 2 * cout * tm * 4             # double-buffered output tiles
                  + 2 * cout * kk * itemsize      # weight
                  + 8 * cout * 4)                 # gamma/beta + accumulators
    y_bytes = nmt * cout * tm * 4                 # resident f32 conv output
    resident_y = (y_bytes + pipe_bytes + (2 << 20)) <= _VMEM_BUDGET

    if resident_y:
        # Pin the patch block index during phase 1 so the im2col matrix is read only once.
        p_index = lambda ph, i: (0, i * (1 - ph) + (nmt - 1) * ph)
        vmem_limit = min(_VMEM_BUDGET,
                         max(32 * 1024 * 1024, y_bytes + pipe_bytes + (8 << 20)))
        scratch = [pltpu.VMEM((cout, 1), jnp.float32),          # sum accumulator -> scale
                   pltpu.VMEM((cout, 1), jnp.float32),          # sumsq accumulator -> shift
                   pltpu.VMEM((nmt, cout, tm), jnp.float32)]    # resident conv output
    else:
        p_index = lambda ph, i: (0, i)                          # stream p in both phases
        vmem_limit = 32 * 1024 * 1024
        scratch = [pltpu.VMEM((cout, 1), jnp.float32),
                   pltpu.VMEM((cout, 1), jnp.float32)]

    kernel = functools.partial(_dcgan_conv_kernel, m_total=float(m),
                               resident_y=resident_y)

    out_t = pl.pallas_call(
        kernel,
        out_shape=jax.ShapeDtypeStruct((cout, m_pad), jnp.float32),
        grid_spec=pltpu.PrefetchScalarGridSpec(
            num_scalar_prefetch=0,
            grid=(2, nmt),   # (phase, m-tile); phase 0 = conv+stats, phase 1 = affine+LeakyReLU
            in_specs=[
                pl.BlockSpec((cout, kk), lambda ph, i: (0, 0)),   # weight, resident
                pl.BlockSpec((kk, tm), p_index),                  # patch tile
                pl.BlockSpec((cout, 1), lambda ph, i: (0, 0)),    # gamma
                pl.BlockSpec((cout, 1), lambda ph, i: (0, 0)),    # beta
            ],
            # Output index pinned to block 0 during phase 0 so the (unwritten) output
            # buffer is never flushed to HBM during the stats pass.
            out_specs=pl.BlockSpec((cout, tm), lambda ph, i: (0, i * ph)),
            scratch_shapes=scratch,
        ),
        compiler_params=pltpu.CompilerParams(
            dimension_semantics=("arbitrary", "arbitrary"),
            vmem_limit_bytes=int(vmem_limit),
        ),
    )(w_t, p_t, g2, b2)

    # [Cout, M_pad] -> drop padding -> [Cout, N, Ho, Wo] -> NCHW
    return out_t[:, :m].reshape(cout, n, ho, wo).transpose(1, 0, 2, 3)


def reference_forward(x, weight, bias, gamma, beta, *, stride=2, pad=1):
    """Pure-JAX reference mirroring PyTorch semantics (training-mode BN)."""
    y = jax.lax.conv_general_dilated(
        x, weight, window_strides=(stride, stride),
        padding=((pad, pad), (pad, pad)),
        dimension_numbers=("NCHW", "OIHW", "NCHW"),
    ) + bias.reshape(1, -1, 1, 1)
    mean = jnp.mean(y, axis=(0, 2, 3), keepdims=True)
    var = jnp.mean((y - mean) ** 2, axis=(0, 2, 3), keepdims=True)
    y_hat = (y - mean) * jax.lax.rsqrt(var + EPS)
    z = gamma.reshape(1, -1, 1, 1) * y_hat + beta.reshape(1, -1, 1, 1)
    return jnp.where(z > 0, z, NEG_SLOPE * z)


if __name__ == "__main__":
    key = jax.random.PRNGKey(0)
    k_x, k_w, k_b, k_g, k_be = jax.random.split(key, 5)

    # Small shapes consistent with dcgan_conv(nin=4, nout=8)
    N, Cin, H, W = 2, 4, 16, 16
    Cout, K = 8, 4

    x = jax.random.normal(k_x, (N, Cin, H, W), dtype=jnp.float32)
    weight = jax.random.normal(k_w, (Cout, Cin, K, K), dtype=jnp.float32) * 0.1
    bias = jax.random.normal(k_b, (Cout,), dtype=jnp.float32) * 0.1
    gamma = 1.0 + 0.1 * jax.random.normal(k_g, (Cout,), dtype=jnp.float32)
    beta = 0.1 * jax.random.normal(k_be, (Cout,), dtype=jnp.float32)

    ref = jax.block_until_ready(reference_forward(x, weight, bias, gamma, beta))

    # Exact path: f32 matmul inputs, tight tolerance.
    out_f32 = jax.block_until_ready(
        dcgan_conv_forward(x, weight, bias, gamma, beta, matmul_dtype=jnp.float32))
    assert out_f32.shape == (N, Cout, H // 2, W // 2), out_f32.shape
    err_f32 = float(jnp.max(jnp.abs(out_f32 - ref)))
    assert jnp.allclose(out_f32, ref, atol=1e-4, rtol=1e-4), err_f32

    # Fast path (default): bf16 matmul inputs, f32 MXU accumulation, f32 BN/LeakyReLU math;
    # tolerance loosened only for bf16 input rounding (~2^-9 relative).
    out_bf16 = jax.block_until_ready(
        dcgan_conv_forward(x, weight, bias, gamma, beta, matmul_dtype=jnp.bfloat16))
    err_bf16 = float(jnp.max(jnp.abs(out_bf16 - ref)))
    assert jnp.allclose(out_bf16, ref, atol=3e-2, rtol=3e-2), err_bf16

    print("KERNEL_OK")
</pallas_src>

<mosaic_0001>
module attributes {stable_mosaic.version = 11 : i64} {
  func.func @_dcgan_conv_kernel(%arg0: i32, %arg1: i32, %arg2: memref<8x64xf32, #tpu.memory_space<vmem>>, %arg3: memref<64x256xf32, #tpu.memory_space<vmem>>, %arg4: memref<8x1xf32, #tpu.memory_space<vmem>>, %arg5: memref<8x1xf32, #tpu.memory_space<vmem>>, %arg6: memref<8x256xf32, #tpu.memory_space<vmem>>, %arg7: memref<8x1xf32, #tpu.memory_space<vmem>>, %arg8: memref<8x1xf32, #tpu.memory_space<vmem>>, %arg9: memref<1x8x256xf32, #tpu.memory_space<vmem>>) attributes {dimension_semantics = [#tpu.dimension_semantics<arbitrary>, #tpu.dimension_semantics<arbitrary>], iteration_bounds = array<i64: 2, 1>, scalar_prefetch = 0 : i64, scratch_operands = 3 : i64, tpu.core_type = #tpu.core_type<tc>, window_params = [{pipeline_mode = #tpu.pipeline_mode<synchronous>, transform_indices = @transform_0, window_bounds = array<i64: 8, 64>}, {transform_indices = @transform_1, window_bounds = array<i64: 64, 256>}, {pipeline_mode = #tpu.pipeline_mode<synchronous>, transform_indices = @transform_2, window_bounds = array<i64: 8, 1>}, {pipeline_mode = #tpu.pipeline_mode<synchronous>, transform_indices = @transform_3, window_bounds = array<i64: 8, 1>}, {transform_indices = @transform_4, window_bounds = array<i64: 8, 256>}]} {
    %c0_i32 = arith.constant 0 : i32
    %0 = arith.cmpi eq, %arg0, %c0_i32 : i32
    %1 = arith.extui %0 : i1 to i32
    %c0_i32_0 = arith.constant 0 : i32
    %2 = arith.cmpi ne, %1, %c0_i32_0 : i32
    scf.if %2 {
      %c0_i32_2 = arith.constant 0 : i32
      %6 = arith.cmpi eq, %arg1, %c0_i32_2 : i32
      %7 = arith.extui %6 : i1 to i32
      %c0_i32_3 = arith.constant 0 : i32
      %8 = arith.cmpi ne, %7, %c0_i32_3 : i32
      scf.if %8 {
        %cst_21 = arith.constant 0.000000e+00 : f32
        %30 = vector.broadcast %cst_21 : f32 to vector<8x1xf32>
        %c0_22 = arith.constant 0 : index
        %c0_23 = arith.constant 0 : index
        %31 = vector.load %arg7[%c0_22, %c0_23] : memref<8x1xf32, #tpu.memory_space<vmem>>, vector<8x1xf32>
        tpu.vector_store %arg7[%c0_22, %c0_23], %30 {strides = array<i32>} : memref<8x1xf32, #tpu.memory_space<vmem>>, vector<8x1xf32>,
        %cst_24 = arith.constant 0.000000e+00 : f32
        %32 = vector.broadcast %cst_24 : f32 to vector<8x1xf32>
        %c0_25 = arith.constant 0 : index
        %c0_26 = arith.constant 0 : index
        %33 = vector.load %arg8[%c0_25, %c0_26] : memref<8x1xf32, #tpu.memory_space<vmem>>, vector<8x1xf32>
        tpu.vector_store %arg8[%c0_25, %c0_26], %32 {strides = array<i32>} : memref<8x1xf32, #tpu.memory_space<vmem>>, vector<8x1xf32>,
      } else {
      }
      %c0 = arith.constant 0 : index
      %c0_4 = arith.constant 0 : index
      %9 = vector.load %arg2[%c0, %c0_4] : memref<8x64xf32, #tpu.memory_space<vmem>>, vector<8x64xf32>
      %c0_5 = arith.constant 0 : index
      %c0_6 = arith.constant 0 : index
      %10 = vector.load %arg3[%c0_5, %c0_6] : memref<64x256xf32, #tpu.memory_space<vmem>>, vector<64x256xf32>
      %cst = arith.constant dense<0.000000e+00> : vector<8x256xf32>
      %11 = tpu.matmul %9, %10, %cst {dimension_numbers = #tpu.dot_dimension_numbers<[1], [0], [0], [1], [0, 0, 1, 1], [], []>} : vector<8x64xf32>, vector<64x256xf32>, vector<8x256xf32> -> vector<8x256xf32>
      %12 = arith.index_cast %arg1 : i32 to index
      %c0_7 = arith.constant 0 : index
      %c0_8 = arith.constant 0 : index
      %13 = vector.load %arg9[%12, %c0_7, %c0_8] : memref<1x8x256xf32, #tpu.memory_space<vmem>>, vector<1x8x256xf32>
      %14 = vector.shape_cast %13 : vector<1x8x256xf32> to vector<8x256xf32>
      %15 = vector.shape_cast %11 : vector<8x256xf32> to vector<1x8x256xf32>
      tpu.vector_store %arg9[%12, %c0_7, %c0_8], %15 {strides = array<i32>} : memref<1x8x256xf32, #tpu.memory_space<vmem>>, vector<1x8x256xf32>,
      %c0_9 = arith.constant 0 : index
      %c0_10 = arith.constant 0 : index
      %16 = vector.load %arg7[%c0_9, %c0_10] : memref<8x1xf32, #tpu.memory_space<vmem>>, vector<8x1xf32>
      %cst_11 = arith.constant dense<0.000000e+00> : vector<8xf32>
      %17 = vector.multi_reduction <add>, %11, %cst_11 [1] : vector<8x256xf32> to vector<8xf32>
      %18 = vector.shape_cast %17 : vector<8xf32> to vector<8x1xf32>
      %19 = arith.addf %16, %18 : vector<8x1xf32>
      %c0_12 = arith.constant 0 : index
      %c0_13 = arith.constant 0 : index
      %20 = vector.load %arg7[%c0_12, %c0_13] : memref<8x1xf32, #tpu.memory_space<vmem>>, vector<8x1xf32>
      tpu.vector_store %arg7[%c0_12, %c0_13], %19 {strides = array<i32>} : memref<8x1xf32, #tpu.memory_space<vmem>>, vector<8x1xf32>,
      %c0_14 = arith.constant 0 : index
      %c0_15 = arith.constant 0 : index
      %21 = vector.load %arg8[%c0_14, %c0_15] : memref<8x1xf32, #tpu.memory_space<vmem>>, vector<8x1xf32>
      %22 = arith.mulf %11, %11 : vector<8x256xf32>
      %cst_16 = arith.constant dense<0.000000e+00> : vector<8xf32>
      %23 = vector.multi_reduction <add>, %22, %cst_16 [1] : vector<8x256xf32> to vector<8xf32>
      %24 = vector.shape_cast %23 : vector<8xf32> to vector<8x1xf32>
      %25 = arith.addf %21, %24 : vector<8x1xf32>
      %c0_17 = arith.constant 0 : index
      %c0_18 = arith.constant 0 : index
      %26 = vector.load %arg8[%c0_17, %c0_18] : memref<8x1xf32, #tpu.memory_space<vmem>>, vector<8x1xf32>
      tpu.vector_store %arg8[%c0_17, %c0_18], %25 {strides = array<i32>} : memref<8x1xf32, #tpu.memory_space<vmem>>, vector<8x1xf32>,
      %c0_i32_19 = arith.constant 0 : i32
      %27 = arith.cmpi eq, %arg1, %c0_i32_19 : i32
      %28 = arith.extui %27 : i1 to i32
      %c0_i32_20 = arith.constant 0 : i32
      %29 = arith.cmpi ne, %28, %c0_i32_20 : i32
      scf.if %29 {
        %c0_21 = arith.constant 0 : index
        %c0_22 = arith.constant 0 : index
        %30 = vector.load %arg7[%c0_21, %c0_22] : memref<8x1xf32, #tpu.memory_space<vmem>>, vector<8x1xf32>
        %cst_23 = arith.constant 7.812500e-03 : f32
        %31 = vector.broadcast %cst_23 : f32 to vector<8x1xf32>
        %32 = arith.mulf %30, %31 : vector<8x1xf32>
        %c0_24 = arith.constant 0 : index
        %c0_25 = arith.constant 0 : index
        %33 = vector.load %arg8[%c0_24, %c0_25] : memref<8x1xf32, #tpu.memory_space<vmem>>, vector<8x1xf32>
        %cst_26 = arith.constant 7.812500e-03 : f32
        %34 = vector.broadcast %cst_26 : f32 to vector<8x1xf32>
        %35 = arith.mulf %33, %34 : vector<8x1xf32>
        %36 = arith.mulf %32, %32 : vector<8x1xf32>
        %37 = arith.subf %35, %36 : vector<8x1xf32>
        %cst_27 = arith.constant 0.000000e+00 : f32
        %38 = vector.broadcast %cst_27 : f32 to vector<8x1xf32>
        %39 = arith.maximumf %37, %38 : vector<8x1xf32>
        %c0_28 = arith.constant 0 : index
        %c0_29 = arith.constant 0 : index
        %40 = vector.load %arg4[%c0_28, %c0_29] : memref<8x1xf32, #tpu.memory_space<vmem>>, vector<8x1xf32>
        %cst_30 = arith.constant 9.99999974E-6 : f32
        %41 = vector.broadcast %cst_30 : f32 to vector<8x1xf32>
        %42 = arith.addf %39, %41 : vector<8x1xf32>
        %43 = math.rsqrt %42 : vector<8x1xf32>
        %44 = arith.mulf %40, %43 : vector<8x1xf32>
        %c0_31 = arith.constant 0 : index
        %c0_32 = arith.constant 0 : index
        %45 = vector.load %arg5[%c0_31, %c0_32] : memref<8x1xf32, #tpu.memory_space<vmem>>, vector<8x1xf32>
        %46 = arith.mulf %32, %44 : vector<8x1xf32>
        %47 = arith.subf %45, %46 : vector<8x1xf32>
        %c0_33 = arith.constant 0 : index
        %c0_34 = arith.constant 0 : index
        %48 = vector.load %arg7[%c0_33, %c0_34] : memref<8x1xf32, #tpu.memory_space<vmem>>, vector<8x1xf32>
        tpu.vector_store %arg7[%c0_33, %c0_34], %44 {strides = array<i32>} : memref<8x1xf32, #tpu.memory_space<vmem>>, vector<8x1xf32>,
        %c0_35 = arith.constant 0 : index
        %c0_36 = arith.constant 0 : index
        %49 = vector.load %arg8[%c0_35, %c0_36] : memref<8x1xf32, #tpu.memory_space<vmem>>, vector<8x1xf32>
        tpu.vector_store %arg8[%c0_35, %c0_36], %47 {strides = array<i32>} : memref<8x1xf32, #tpu.memory_space<vmem>>, vector<8x1xf32>,
      } else {
      }
    } else {
    }
    %c1_i32 = arith.constant 1 : i32
    %3 = arith.cmpi eq, %arg0, %c1_i32 : i32
    %4 = arith.extui %3 : i1 to i32
    %c0_i32_1 = arith.constant 0 : i32
    %5 = arith.cmpi ne, %4, %c0_i32_1 : i32
    scf.if %5 {
      %6 = arith.index_cast %arg1 : i32 to index
      %c0 = arith.constant 0 : index
      %c0_2 = arith.constant 0 : index
      %7 = vector.load %arg9[%6, %c0, %c0_2] : memref<1x8x256xf32, #tpu.memory_space<vmem>>, vector<1x8x256xf32>
      %8 = vector.shape_cast %7 : vector<1x8x256xf32> to vector<8x256xf32>
      %c0_3 = arith.constant 0 : index
      %c0_4 = arith.constant 0 : index
      %9 = vector.load %arg7[%c0_3, %c0_4] : memref<8x1xf32, #tpu.memory_space<vmem>>, vector<8x1xf32>
      %10 = vector.broadcast %9 : vector<8x1xf32> to vector<8x256xf32>
      %11 = arith.mulf %10, %8 : vector<8x256xf32>
      %c0_5 = arith.constant 0 : index
      %c0_6 = arith.constant 0 : index
      %12 = vector.load %arg8[%c0_5, %c0_6] : memref<8x1xf32, #tpu.memory_space<vmem>>, vector<8x1xf32>
      %13 = vector.broadcast %12 : vector<8x1xf32> to vector<8x256xf32>
      %14 = arith.addf %11, %13 : vector<8x256xf32>
      %cst = arith.constant 2.000000e-01 : f32
      %15 = vector.broadcast %cst : f32 to vector<8x256xf32>
      %16 = arith.mulf %15, %14 : vector<8x256xf32>
      %17 = arith.maximumf %14, %16 : vector<8x256xf32>
      %c0_7 = arith.constant 0 : index
      %c0_8 = arith.constant 0 : index
      %18 = vector.load %arg6[%c0_7, %c0_8] : memref<8x256xf32, #tpu.memory_space<vmem>>, vector<8x256xf32>
      tpu.vector_store %arg6[%c0_7, %c0_8], %17 {strides = array<i32>} : memref<8x256xf32, #tpu.memory_space<vmem>>, vector<8x256xf32>,
    } else {
    }
    return
  }
  func.func @transform_0(%arg0: i32, %arg1: i32) -> (i32, i32) {
    %c0_i32 = arith.constant 0 : i32
    %c0_i32_0 = arith.constant 0 : i32
    %c0_i32_1 = arith.constant 0 : i32
    return %c0_i32, %c0_i32_0 : i32, i32
  }
  func.func @transform_1(%arg0: i32, %arg1: i32) -> (i32, i32) {
    %c1_i32 = arith.constant 1 : i32
    %0 = arith.subi %c1_i32, %arg0 : i32
    %1 = arith.muli %arg1, %0 : i32
    %c0_i32 = arith.constant 0 : i32
    %2 = arith.muli %c0_i32, %arg0 : i32
    %3 = arith.addi %1, %2 : i32
    %c0_i32_0 = arith.constant 0 : i32
    %c0_i32_1 = arith.constant 0 : i32
    return %c0_i32_0, %3 : i32, i32
  }
  func.func @transform_2(%arg0: i32, %arg1: i32) -> (i32, i32) {
    %c0_i32 = arith.constant 0 : i32
    %c0_i32_0 = arith.constant 0 : i32
    %c0_i32_1 = arith.constant 0 : i32
    return %c0_i32, %c0_i32_0 : i32, i32
  }
  func.func @transform_3(%arg0: i32, %arg1: i32) -> (i32, i32) {
    %c0_i32 = arith.constant 0 : i32
    %c0_i32_0 = arith.constant 0 : i32
    %c0_i32_1 = arith.constant 0 : i32
    return %c0_i32, %c0_i32_0 : i32, i32
  }
  func.func @transform_4(%arg0: i32, %arg1: i32) -> (i32, i32) {
    %0 = arith.muli %arg1, %arg0 : i32
    %c0_i32 = arith.constant 0 : i32
    %c0_i32_0 = arith.constant 0 : i32
    return %c0_i32, %0 : i32, i32
  }
}

</mosaic_0001>

<llo_original>
// kernel: tpu_custom_call.1
$region0: #{tpu_custom_call.1}
  #allocation0 [shape = 'u32[]', space=smem, size = 0x4, offset = 0x4, fixed_abs, tag = 'smem constant byte address 0x4 - core index']
  #allocation1 [shape = 'u32[144,128]{1,0:T(1,128)}', space=vmem, size = 0x12000, scoped, tag = 'internal scratch']
  #allocation2 [shape = 'f32[8,1]{1,0:T(8,128)}', space=vmem, size = 0x1000, scoped, tag = 'scratch operand']
  #allocation3 [shape = 'f32[8,1]{1,0:T(8,128)}', space=vmem, size = 0x1000, scoped, tag = 'scratch operand']
  #allocation4 [shape = 'f32[1,8,256]{2,1,0:T(8,128)}', space=vmem, size = 0x2000, scoped, tag = 'scratch operand']
  %s0 = inlined_call_operand.vmem [shape: f32[8,64], index: 0, kind: input, shape index: {}]
  %s1 = inlined_call_operand.hbm [shape: f32[64,256], index: 1, kind: input, shape index: {}]
  %s2 = inlined_call_operand.vmem [shape: f32[8,1], index: 2, kind: input, shape index: {}]
  %s3 = inlined_call_operand.vmem [shape: f32[8,1], index: 3, kind: input, shape index: {}]
  %s4 = inlined_call_operand.hbm [shape: f32[8,256], index: 4, kind: output, shape index: {}]
  %s5 = sld [smem:[#allocation0]]
  $region69: #{tpu_custom_call.1} parent=0
    _
  %s7 = ssub.s32 1, %s5
  %s8 = scalar_select 0, %s7, %s5
  $region1: #{tpu_custom_call.1} parent=0
    #allocation5 [shape = 'u8[131072]{0}', space=vmem, size = 0x20000, scoped, tag = 'input window, operand 1']
    #allocation6 [shape = 's32[2]{0}', space=sflag, size = 0x8, scoped, tag = 'scoped memory for tpu_custom_call.1']
    #allocation7 [shape = 's32[2]{0}', space=sflag, size = 0x8, scoped, tag = 'scoped memory for tpu_custom_call.1']
    #allocation8 [shape = 'u8[16384]{0}', space=vmem, size = 0x4000, scoped, tag = 'output window, operand 0']
    %9 = vsyncpa [#allocation6], 0
    %s10 = scalar_lea.sflag [#allocation6], 1
    %11 = vsyncpa %s10, 0
    %12 = vsyncpa [#allocation7], 0
    %s13 = scalar_lea.sflag [#allocation7], 1
    %14 = vsyncpa %s13, 0
    loop: start=0, step=1, limit=4
    $region2: #{tpu_custom_call.1} parent=1 // loop_pre_header
      _
    $region3: #{tpu_custom_call.1} parent=1 // loop_header
      %s16 = sphi 0, %s20
      %p17 = scmp.ge.s32.totalorder %s16, 4
      %s23 = sphi 0, %s35
      %s24 = sphi 0, %s31
      %s25 = sphi 0, %s23
      %s26 = sphi 0, %s24
      %s27 = sphi 0, %s25
      %s28 = sphi 0, %s26
      %s36 = sphi 0, %s36
      %s38 = sphi 0, %s36
      %s39 = sphi 0, %s38
      %s53 = sphi 0, %s39
      %s63 = sphi 0, %s65
      %s66 = sphi 0, %s63
      %s67 = sphi 0, %s66
      %s83 = sphi 0, %s67
      %s87 = sphi 0, %s87
      %s89 = sphi 0, %s87
      %s90 = sphi 0, %s89
      %s104 = sphi 0, %s90
      %s108 = sphi 0, %s108
      %s110 = sphi 0, %s108
      %s111 = sphi 0, %s110
      %s125 = sphi 0, %s111
      %s133 = sphi 0, %s135
      %s136 = sphi 0, %s133
      %s137 = sphi 0, %s136
      %s153 = sphi 0, %s137
    $region4: #{tpu_custom_call.1} parent=1 // loop_header_branch
      %19 = sbr.rel (%p17) target = $region8
    $region5: #{tpu_custom_call.1} parent=1 // loop_body
      %s21 = ssub.s32 %s16, 1
      %s22 = ssub.s32 %s16, 2
      %s29 = sadd.s32 1, %s24
      %p30 = scmp.ge.s32.totalorder %s29, 1
      %s31 = scalar_select %p30, 0, %s29
      %s32 = sadd.s32 1, %s23
      %s33 = scalar_select %p30, %s32, %s23
      %p34 = scmp.ge.s32.totalorder %s33, 2
      %s35 = scalar_select %p34, 0, %s33
      %s37 = sadd.s32 %s36, 1
      %p40 = scmp.eq.s32.totalorder %s16, 1
      %p41 = scmp.ne.s32.totalorder %s36, %s38
      %p42 = scmp.eq.s32.totalorder %s16, 0
      %p43 = por %p41, %p42
      %p44 = scmp.ne.s32.totalorder %s36, %s38
      %p45 = scmp.eq.s32.totalorder %s21, 1
      %p46 = por %p44, %p45
      %p47 = scmp.ne.s32.totalorder %s38, %s39
      %p48 = scmp.eq.s32.totalorder %s21, 0
      %p49 = por %p47, %p48
      %p50 = scmp.ne.s32.totalorder %s38, %s39
      %p51 = scmp.eq.s32.totalorder %s22, 1
      %p52 = por %p50, %p51
      %p54 = scmp.ne.s32.totalorder %s39, %s53
      %p55 = scmp.eq.s32.totalorder %s22, 0
      %p56 = por %p54, %p55
      %s57 = ssub.s32 1, %s23
      %s58 = smul.u32 %s24, %s57
      %s59 = ssub.s32 1, %s35
      %s60 = smul.u32 %s31, %s59
      %s61 = ssub.s32 %s58, %s60
      %p62 = scmp.eq.s32.totalorder %s61, 0
      %s64 = sadd.s32 %s63, 1
      %s65 = scalar_select %p62, %s63, %s64
      %p68 = pneg %p62
      %p69 = scmp.eq.s32.totalorder %s16, 1
      %p70 = por %p68, %p69
      %p71 = scmp.ne.s32.totalorder %s63, %s66
      %p72 = scmp.eq.s32.totalorder %s16, 0
      %p73 = por %p71, %p72
      %p74 = scmp.ne.s32.totalorder %s63, %s66
      %p75 = scmp.eq.s32.totalorder %s21, 1
      %p76 = por %p74, %p75
      %p77 = scmp.ne.s32.totalorder %s66, %s67
      %p78 = scmp.eq.s32.totalorder %s21, 0
      %p79 = por %p77, %p78
      %p80 = scmp.ne.s32.totalorder %s66, %s67
      %p81 = scmp.eq.s32.totalorder %s22, 1
      %p82 = por %p80, %p81
      %p84 = scmp.ne.s32.totalorder %s67, %s83
      %p85 = scmp.eq.s32.totalorder %s22, 0
      %p86 = por %p84, %p85
      %s88 = sadd.s32 %s87, 1
      %p91 = scmp.eq.s32.totalorder %s16, 1
      %p92 = scmp.ne.s32.totalorder %s87, %s89
      %p93 = scmp.eq.s32.totalorder %s16, 0
      %p94 = por %p92, %p93
      %p95 = scmp.ne.s32.totalorder %s87, %s89
      %p96 = scmp.eq.s32.totalorder %s21, 1
      %p97 = por %p95, %p96
      %p98 = scmp.ne.s32.totalorder %s89, %s90
      %p99 = scmp.eq.s32.totalorder %s21, 0
      %p100 = por %p98, %p99
      %p101 = scmp.ne.s32.totalorder %s89, %s90
      %p102 = scmp.eq.s32.totalorder %s22, 1
      %p103 = por %p101, %p102
      %p105 = scmp.ne.s32.totalorder %s90, %s104
      %p106 = scmp.eq.s32.totalorder %s22, 0
      %p107 = por %p105, %p106
      %s109 = sadd.s32 %s108, 1
      %p112 = scmp.eq.s32.totalorder %s16, 1
      %p113 = scmp.ne.s32.totalorder %s108, %s110
      %p114 = scmp.eq.s32.totalorder %s16, 0
      %p115 = por %p113, %p114
      %p116 = scmp.ne.s32.totalorder %s108, %s110
      %p117 = scmp.eq.s32.totalorder %s21, 1
      %p118 = por %p116, %p117
      %p119 = scmp.ne.s32.totalorder %s110, %s111
      %p120 = scmp.eq.s32.totalorder %s21, 0
      %p121 = por %p119, %p120
      %p122 = scmp.ne.s32.totalorder %s110, %s111
      %p123 = scmp.eq.s32.totalorder %s22, 1
      %p124 = por %p122, %p123
      %p126 = scmp.ne.s32.totalorder %s111, %s125
      %p127 = scmp.eq.s32.totalorder %s22, 0
      %p128 = por %p126, %p127
      %s129 = smul.u32 %s24, %s23
      %s130 = smul.u32 %s31, %s35
      %s131 = ssub.s32 %s129, %s130
      %p132 = scmp.eq.s32.totalorder %s131, 0
      %s134 = sadd.s32 %s133, 1
      %s135 = scalar_select %p132, %s133, %s134
      %p138 = pneg %p132
      %p139 = scmp.eq.s32.totalorder %s16, 1
      %p140 = por %p138, %p139
      %p141 = scmp.ne.s32.totalorder %s133, %s136
      %p142 = scmp.eq.s32.totalorder %s16, 0
      %p143 = por %p141, %p142
      %p144 = scmp.ne.s32.totalorder %s133, %s136
      %p145 = scmp.eq.s32.totalorder %s21, 1
      %p146 = por %p144, %p145
      %p147 = scmp.ne.s32.totalorder %s136, %s137
      %p148 = scmp.eq.s32.totalorder %s21, 0
      %p149 = por %p147, %p148
      %p150 = scmp.ne.s32.totalorder %s136, %s137
      %p151 = scmp.eq.s32.totalorder %s22, 1
      %p152 = por %p150, %p151
      %p154 = scmp.ne.s32.totalorder %s137, %s153
      %p155 = scmp.eq.s32.totalorder %s22, 0
      %p156 = por %p154, %p155
      %p157 = scmp.le.s32.totalorder 1, %s16
      %p158 = scmp.lt.s32.totalorder %s16, 3
      %p159 = pnand %p157, %p158
      %p160 = pneg %p159
      // Predicated region
      $region9: #{tpu_custom_call.1} parent=5 // pred_check
        _
      $region10: #{tpu_custom_call.1} parent=5 // pred_check_branch
        %162 = sbr.rel (%p159) target = $region12
      $region11: #{tpu_custom_call.1} parent=5 // pred_region
        %s163 = ssub.s32 %s16, 1
        // Predicated region
        $region13: #{tpu_custom_call.1} parent=11 // pred_check
          %p164 = pneg %p49
        $region14: #{tpu_custom_call.1} parent=11 // pred_check_branch
          %166 = sbr.rel (%p164) target = $region16
        $region15: #{tpu_custom_call.1} parent=11 // pred_region
          _
        $region16: #{tpu_custom_call.1} parent=11 // pred_fallthru
          _
        // Predicated region
        $region17: #{tpu_custom_call.1} parent=11 // pred_check
          %p167 = pneg %p100
        $region18: #{tpu_custom_call.1} parent=11 // pred_check_branch
          %169 = sbr.rel (%p167) target = $region20
        $region19: #{tpu_custom_call.1} parent=11 // pred_region
          _
        $region20: #{tpu_custom_call.1} parent=11 // pred_fallthru
          _
        // Predicated region
        $region21: #{tpu_custom_call.1} parent=11 // pred_check
          %p170 = pneg %p121
        $region22: #{tpu_custom_call.1} parent=11 // pred_check_branch
          %172 = sbr.rel (%p170) target = $region24
        $region23: #{tpu_custom_call.1} parent=11 // pred_region
          _
        $region24: #{tpu_custom_call.1} parent=11 // pred_fallthru
          _
      $region12: #{tpu_custom_call.1} parent=5 // pred_fallthru
        _
      %p173 = scmp.lt.s32.totalorder %s16, 2
      // Predicated region
      $region25: #{tpu_custom_call.1} parent=5 // pred_check
        %p174 = pneg %p173
      $region26: #{tpu_custom_call.1} parent=5 // pred_check_branch
        %176 = sbr.rel (%p174) target = $region28
      $region27: #{tpu_custom_call.1} parent=5 // pred_region
        // Predicated region
        $region29: #{tpu_custom_call.1} parent=27 // pred_check
          %p177 = pneg %p73
        $region30: #{tpu_custom_call.1} parent=27 // pred_check_branch
          %179 = sbr.rel (%p177) target = $region32
        $region31: #{tpu_custom_call.1} parent=27 // pred_region
          %s180 = sand.u32 %s63, 1
          %s181 = scalar_lea.sflag [#allocation6], %s180
          %s182 = sand.u32 %s63, 1
          %s183 = smul.addr %s182, 128
          %s184 = scalar_lea.vmem [#allocation5], %s183
          %s185 = ssub.s32 1, %s23
          %s186 = smul.u32 %s24, %s185
          %s187 = smul.u32 2, %s186
          %s189 = ssub.s32 2048, 2048
          %190 = vsyncadd %s181, %s189
          %s191 = smul.addr %s187, 128
          %s192 = scalar_lea.hbm %s1, %s191
          %s193 = sshll.u32 %s184, 4
          %s194 = int_to_ptr.vmem [resolvable:$true] %s193
          %199 = dma.hbm_to_vmem [thread:$0]  %s192, 2048, %s194, %s181, 256, 256, 16
        $region32: #{tpu_custom_call.1} parent=27 // pred_fallthru
          _
      $region28: #{tpu_custom_call.1} parent=5 // pred_fallthru
        _
      %p200 = scmp.le.s32.totalorder 1, %s16
      %p201 = scmp.lt.s32.totalorder %s16, 3
      %p202 = pnand %p200, %p201
      %p203 = pneg %p202
      // Predicated region
      $region33: #{tpu_custom_call.1} parent=5 // pred_check
        _
      $region34: #{tpu_custom_call.1} parent=5 // pred_check_branch
        %205 = sbr.rel (%p202) target = $region36
      $region35: #{tpu_custom_call.1} parent=5 // pred_region
        %s206 = ssub.s32 %s16, 1
        %s207 = sand.u32 %s66, 1
        %s208 = scalar_lea.sflag [#allocation6], %s207
        %s209 = sand.u32 %s66, 1
        %s210 = smul.addr %s209, 128
        %s211 = scalar_lea.vmem [#allocation5], %s210
        // Predicated region
        $region37: #{tpu_custom_call.1} parent=35 // pred_check
          %p212 = pneg %p79
        $region38: #{tpu_custom_call.1} parent=35 // pred_check_branch
          %214 = sbr.rel (%p212) target = $region40
        $region39: #{tpu_custom_call.1} parent=35 // pred_region
          %215 = dma.done %s208, 2048
        $region40: #{tpu_custom_call.1} parent=35 // pred_fallthru
          _
        %p216 = pneg %p49
        %p217 = pneg %p46
        %s218 = sand.u32 %s66, 1
        %s219 = scalar_lea.sflag [#allocation6], %s218
        %s220 = sand.u32 %s66, 1
        %s221 = smul.addr %s220, 128
        %s222 = scalar_lea.vmem [#allocation5], %s221
        %p223 = pneg %p79
        %p224 = pneg %p76
        %p225 = pneg %p100
        %p226 = pneg %p97
        %p227 = pneg %p121
        %p228 = pneg %p118
        %p229 = pneg %p149
        %p230 = pneg %p146
        %s231 = sand.u32 %s136, 1
        %s232 = scalar_lea.sflag [#allocation7], %s231
        %s233 = sand.u32 %s136, 1
        %s234 = smul.addr %s233, 16
        %s235 = scalar_lea.vmem [#allocation8], %s234
        %s236 = ssub.s32 1, %s25
        %s237 = smul.u32 %s26, %s236
        %s238 = smul.u32 2, %s237
        %s239 = smul.u32 %s26, %s25
        %s240 = smul.u32 2, %s239
        %p241 = scmp.eq.s32.totalorder %s25, 0
        // Predicated region
        $region41: #{tpu_custom_call.1} parent=35 // pred_check
          %p242 = pneg %p241
        $region42: #{tpu_custom_call.1} parent=35 // pred_check_branch
          %244 = sbr.rel (%p242) target = $region44
        $region43: #{tpu_custom_call.1} parent=35 // pred_region
          %p245 = scmp.eq.s32.totalorder %s26, 0
          // Predicated region
          $region45: #{tpu_custom_call.1} parent=43 // pred_check
            %p246 = pneg %p245
          $region46: #{tpu_custom_call.1} parent=43 // pred_check_branch
            %248 = sbr.rel (%p246) target = $region48
          $region47: #{tpu_custom_call.1} parent=43 // pred_region
            %vm249 = vcmask 7168
            %250 = vst.msk [vmem:[#allocation2] sm:$0xff] %vm249, 0.0
            %251 = vst.msk [vmem:[#allocation3] sm:$0xff] %vm249, 0.0
          $region48: #{tpu_custom_call.1} parent=43 // pred_fallthru
            _
          %v252 = vld [vmem:[%s0] sm:$0xff]
          %v253 = vld [vmem:[%s211] sm:$0xff]
          %v254 = vld [vmem:[%s211 + $0x8] sm:$0xff]
          %v255 = vld [vmem:[%s211 + $0x10] sm:$0xff]
          %v256 = vld [vmem:[%s211 + $0x18] sm:$0xff]
          %v257 = vld [vmem:[%s211 + $0x20] sm:$0xff]
          %v258 = vld [vmem:[%s211 + $0x28] sm:$0xff]
          %v259 = vld [vmem:[%s211 + $0x30] sm:$0xff]
          %v260 = vld [vmem:[%s211 + $0x38] sm:$0xff]
          %v261 = vld [vmem:[%s211 + $0x40] sm:$0xff]
          %v262 = vld [vmem:[%s211 + $0x48] sm:$0xff]
          %v263 = vld [vmem:[%s211 + $0x50] sm:$0xff]
          %v264 = vld [vmem:[%s211 + $0x58] sm:$0xff]
          %v265 = vld [vmem:[%s211 + $0x60] sm:$0xff]
          %v266 = vld [vmem:[%s211 + $0x68] sm:$0xff]
          %v267 = vld [vmem:[%s211 + $0x70] sm:$0xff]
          %v268 = vld [vmem:[%s211 + $0x78] sm:$0xff]
          %vm269 = vcmask 523264
          %v271 = vsel %vm269, %v252, 0
          %273 = vmatprep.subr.mxu0 0.0
          %274 = vmatpush1.msra.mxu0 0.0
          %275 = vmatprep.subr.mxu0 0.0
          %276 = vmatpush1.msra.mxu0 0.0
          %277 = vmatprep.subr.mxu0 0.0
          %278 = vmatpush1.msra.mxu0 0.0
          %279 = vmatprep.subr.mxu0 0.0
          %280 = vmatpush1.msra.mxu0 0.0
          %281 = vmatprep.subr.mxu0 0.0
          %282 = vmatpush1.msra.mxu0 0.0
          %283 = vmatprep.subr.mxu0 0.0
          %284 = vmatpush1.msra.mxu0 0.0
          %285 = vmatprep.subr.mxu0 0.0
          %286 = vmatpush1.msra.mxu0 0.0
          %287 = vmatprep.subr.mxu0 0.0
          %288 = vmatpush1.msra.mxu0 0.0
          %289 = vmatprep.subr.mxu0 %v268
          %290 = vmatpush1.msra.mxu0 %v267
          %291 = vmatprep.subr.mxu0 %v266
          %292 = vmatpush1.msra.mxu0 %v265
          %293 = vmatprep.subr.mxu0 %v264
          %294 = vmatpush1.msra.mxu0 %v263
          %295 = vmatprep.subr.mxu0 %v262
          %296 = vmatpush1.msra.mxu0 %v261
          %297 = vmatprep.subr.mxu0 %v260
          %298 = vmatpush1.msra.mxu0 %v259
          %299 = vmatprep.subr.mxu0 %v258
          %300 = vmatpush1.msra.mxu0 %v257
          %301 = vmatprep.subr.mxu0 %v256
          %302 = vmatpush1.msra.mxu0 %v255
          %303 = vmatprep.subr.mxu0 %v254
          %304 = vmatpush1.msra.mxu0 %v253
          %305 = vmatprep.subr.mxu0 0.0
          %306 = vmatpush2.msra.mxu0 0.0
          %307 = vmatprep.subr.mxu0 0.0
          %308 = vmatpush2.msra.mxu0 0.0
          %309 = vmatprep.subr.mxu0 0.0
          %310 = vmatpush2.msra.mxu0 0.0
          %311 = vmatprep.subr.mxu0 0.0
          %312 = vmatpush2.msra.mxu0 0.0
          %313 = vmatprep.subr.mxu0 0.0
          %314 = vmatpush2.msra.mxu0 0.0
          %315 = vmatprep.subr.mxu0 0.0
          %316 = vmatpush2.msra.mxu0 0.0
          %317 = vmatprep.subr.mxu0 0.0
          %318 = vmatpush2.msra.mxu0 0.0
          %319 = vmatprep.subr.mxu0 0.0
          %320 = vmatpush2.msra.mxu0 0.0
          %321 = vmatprep.subr.mxu0 0.0
          %322 = vmatpush2.msra.mxu0 0.0
          %323 = vmatprep.subr.mxu0 0.0
          %324 = vmatpush2.msra.mxu0 0.0
          %325 = vmatprep.subr.mxu0 0.0
          %326 = vmatpush2.msra.mxu0 0.0
          %327 = vmatprep.subr.mxu0 0.0
          %328 = vmatpush2.msra.mxu0 0.0
          %329 = vmatprep.subr.mxu0 0.0
          %330 = vmatpush2.msra.mxu0 0.0
          %331 = vmatprep.subr.mxu0 0.0
          %332 = vmatpush2.msra.mxu0 0.0
          %333 = vmatprep.subr.mxu0 0.0
          %334 = vmatpush2.msra.mxu0 0.0
          %335 = vmatprep.subr.mxu0 0.0
          %336 = vmatpush2.msra.mxu0 0.0
          %337 = vmatprep.mubr.f32.mxu0 0.0
          %338 = vmatmul.mubr.f32.gmra.mxu0 %v271
          %v339 = vpop.f32.mrf.mxu0
          %v340 = vadd.f32 0.0, %v339
          %v341 = vpop.f32.mrf.mxu0
          %v342 = vadd.f32 0.0, %v341
          %343 = vdwg.mxu0
          %s344 = smul.u32 %s26, 2
          %s345 = smul.addr %s344, 8
          %s346 = scalar_lea.vmem [#allocation4], %s345
          %347 = vst [vmem:[%s346] sm:$0xff] %v340
          %348 = vst [vmem:[%s346 + $0x8] sm:$0xff] %v342
          %v349 = vld [vmem:[#allocation2] sm:$0xff]
          %v350 = vadd.f32 %v340, %v342
          %351 = vadd.xlane.f32.xlu0 %v350
          %v352 = vpop.xlane.xlu0 %351
          %v353 = vadd.f32 %v349, %v352
          %vm354 = vcmask 7168
          %355 = vst.msk [vmem:[#allocation2] sm:$0xff] %vm354, %v353
          %v356 = vld [vmem:[#allocation3] sm:$0xff]
          %v357 = vmul.f32 %v340, %v340
          %v358 = vmul.f32 %v342, %v342
          %v359 = vadd.f32 %v357, %v358
          %360 = vadd.xlane.f32.xlu0 %v359
          %v361 = vpop.xlane.xlu0 %360
          %v362 = vadd.f32 %v356, %v361
          %363 = vst.msk [vmem:[#allocation3] sm:$0xff] %vm354, %v362
          // Predicated region
          $region49: #{tpu_custom_call.1} parent=43 // pred_check
            %p364 = pneg %p245
          $region50: #{tpu_custom_call.1} parent=43 // pred_check_branch
            %366 = sbr.rel (%p364) target = $region52
          $region51: #{tpu_custom_call.1} parent=43 // pred_region
            %v367 = vld [vmem:[#allocation2] sm:$0xff]
            %v368 = vmul.f32 %v367, 0.0078125
            %v369 = vld [vmem:[#allocation3] sm:$0xff]
            %v370 = vmul.f32 %v369, 0.0078125
            %v371 = vmul.f32 %v368, %v368
            %v372 = vsub.f32 %v370, %v371
            %v373 = vmax.f32 %v372, 0.0
            %v374 = vld [vmem:[%s2] sm:$0xff]
            %v375 = vadd.f32 %v373, 1e-05
            %v376 = vrsqrt.pop %v375
            %v377 = vmul.f32 %v374, %v376
            %v378 = vld [vmem:[%s3] sm:$0xff]
            %v379 = vmul.f32 %v368, %v377
            %v380 = vsub.f32 %v378, %v379
            %381 = vst.msk [vmem:[#allocation2] sm:$0xff] %vm354, %v377
            %382 = vst.msk [vmem:[#allocation3] sm:$0xff] %vm354, %v380
          $region52: #{tpu_custom_call.1} parent=43 // pred_fallthru
            _
        $region44: #{tpu_custom_call.1} parent=35 // pred_fallthru
          _
        %p383 = scmp.eq.s32.totalorder %s25, 1
        // Predicated region
        $region53: #{tpu_custom_call.1} parent=35 // pred_check
          %p384 = pneg %p383
        $region54: #{tpu_custom_call.1} parent=35 // pred_check_branch
          %386 = sbr.rel (%p384) target = $region56
        $region55: #{tpu_custom_call.1} parent=35 // pred_region
          %s387 = smul.u32 %s26, 2
          %s388 = smul.addr %s387, 8
          %s389 = scalar_lea.vmem [#allocation4], %s388
          %v390 = vld [vmem:[%s389] sm:$0xff]
          %v391 = vld [vmem:[%s389 + $0x8] sm:$0xff]
          %v392 = vld [vmem:[#allocation2] sm:$0xff]
          %394 = vset.pattern.permute.xlu0 0
          %395 = vperm.xlu0 %394, %v392
          %v396 = vpop.permute.xlu0 %395
          %v398 = vmul.f32 %v396, %v390
          %v399 = vmul.f32 %v396, %v391
          %v400 = vld [vmem:[#allocation3] sm:$0xff]
          %402 = vset.pattern.permute.xlu0 0
          %403 = vperm.xlu0 %402, %v400
          %v404 = vpop.permute.xlu0 %403
          %v406 = vadd.f32 %v398, %v404
          %v407 = vadd.f32 %v399, %v404
          %v408 = vmul.f32 %v406, 0.2
          %v409 = vmul.f32 %v407, 0.2
          %v410 = vmax.f32 %v406, %v408
          %v411 = vmax.f32 %v407, %v409
          %412 = vst [vmem:[%s235] sm:$0xff] %v410
          %413 = vst [vmem:[%s235 + $0x8] sm:$0xff] %v411
        $region56: #{tpu_custom_call.1} parent=35 // pred_fallthru
          _
        %s414 = sand.u32 %s136, 1
        %s415 = scalar_lea.sflag [#allocation7], %s414
        %s416 = sand.u32 %s136, 1
        %s417 = smul.addr %s416, 16
        %s418 = scalar_lea.vmem [#allocation8], %s417
        // Predicated region
        $region57: #{tpu_custom_call.1} parent=35 // pred_check
          %p419 = pneg %p146
        $region58: #{tpu_custom_call.1} parent=35 // pred_check_branch
          %421 = sbr.rel (%p419) target = $region60
        $region59: #{tpu_custom_call.1} parent=35 // pred_region
          %s422 = smul.u32 %s26, %s25
          %s423 = smul.u32 2, %s422
          %s425 = ssub.s32 256, 256
          %426 = vsyncadd %s415, %s425
          %s427 = smul.addr %s423, 128
          %s428 = scalar_lea.hbm %s4, %s427
          %s430 = sshll.u32 %s418, 4
          %s431 = int_to_ptr.vmem [resolvable:$true] %s430
          %433 = dma.vmem_to_hbm [thread:$0]  %s431, 256, %s428, %s415
        $region60: #{tpu_custom_call.1} parent=35 // pred_fallthru
          _
      $region36: #{tpu_custom_call.1} parent=5 // pred_fallthru
        _
      %p434 = scmp.le.s32.totalorder 2, %s16
      // Predicated region
      $region61: #{tpu_custom_call.1} parent=5 // pred_check
        %p435 = pneg %p434
      $region62: #{tpu_custom_call.1} parent=5 // pred_check_branch
        %437 = sbr.rel (%p435) target = $region64
      $region63: #{tpu_custom_call.1} parent=5 // pred_region
        %s438 = ssub.s32 %s16, 2
        // Predicated region
        $region65: #{tpu_custom_call.1} parent=63 // pred_check
          %p439 = pneg %p152
        $region66: #{tpu_custom_call.1} parent=63 // pred_check_branch
          %441 = sbr.rel (%p439) target = $region68
        $region67: #{tpu_custom_call.1} parent=63 // pred_region
          %s442 = sand.u32 %s137, 1
          %s443 = scalar_lea.sflag [#allocation7], %s442
          %s444 = sand.u32 %s137, 1
          %s445 = smul.addr %s444, 16
          %s446 = scalar_lea.vmem [#allocation8], %s445
          %447 = dma.done %s443, 256
        $region68: #{tpu_custom_call.1} parent=63 // pred_fallthru
          _
      $region64: #{tpu_custom_call.1} parent=5 // pred_fallthru
        _
    $region6: #{tpu_custom_call.1} parent=1 // loop_footer
      %s20 = sadd.s32 1, %s16
    $region7: #{tpu_custom_call.1} parent=1 // loop_footer_branch
      %15 = sbr.rel target = $region3
    $region8: #{tpu_custom_call.1} parent=1 // loop_exit
      _
    %448 = vsyncpa [#allocation6], 1
    %s449 = scalar_lea.sflag [#allocation6], 1
    %450 = vsyncpa %s449, 1
    %451 = vsyncpa [#allocation7], 1
    %s452 = scalar_lea.sflag [#allocation7], 1
    %453 = vsyncpa %s452, 1

</llo_original>
